<compile_context>
chip_gen: v5e
topology: v5e:2x2
jax: 0.10.0
libtpu: 0.0.40
codegen_flags: <defaults>
</compile_context>

<pallas_src>
import functools

import jax
import jax.numpy as jnp
from jax.experimental import pallas as pl
from jax.experimental.pallas import tpu as pltpu


LANE = 128  # TPU lane width; hidden / output feature dims padded to this.


# ----------------------------- Pallas kernel ------------------------------ #
def _generator_kernel(z_ref, w1_ref, b1_ref, w2_ref, b2_ref, wo_ref, bo_ref,
                      out_ref):
    # hidden layer 1: Linear + LeakyReLU(0.2)
    # z is already bf16 (cast in wrapper); f32 accumulation on the MXU.
    h = jnp.dot(z_ref[...], w1_ref[...],
                preferred_element_type=jnp.float32) + b1_ref[...]
    h = jnp.maximum(h, 0.2 * h)

    # hidden layer 2: Linear + LeakyReLU(0.2)
    h = jnp.dot(h.astype(jnp.bfloat16), w2_ref[...],
                preferred_element_type=jnp.float32) + b2_ref[...]
    h = jnp.maximum(h, 0.2 * h)

    # spectrally-normalized output Linear + tanh
    o = jnp.dot(h.astype(jnp.bfloat16), wo_ref[...],
                preferred_element_type=jnp.float32) + bo_ref[...]
    out_ref[...] = jnp.tanh(o)


# ------------------------------- helpers ----------------------------------- #
def _round_up(x, m):
    return (x + m - 1) // m * m


def _pad2d(x, rows, cols):
    return jnp.pad(x, ((0, rows - x.shape[0]), (0, cols - x.shape[1])))


def _choose_batch_tile(batch):
    """Batch tile: multiple of 16, capped at 1024, >=2 grid steps when big."""
    tb = min(1024, _round_up(batch, 16))
    # If the whole batch fits one tile and the tile is non-toy, split in two so
    # v7x's 2 TensorCores both get a grid step (harmless on v5e/v6e).
    if _round_up(batch, tb) // tb == 1 and tb >= 64:
        tb = _round_up(tb // 2, 16)
    b_pad = _round_up(batch, tb)
    return tb, b_pad


# ----------------------- parameter prep (done ONCE) ------------------------ #
def prepare_params(w1, b1, w2, b2, wo_sn, bo):
    """Pad feature dims and pre-cast weights to bf16 once, outside the forward.

    Layout: all weights (in, out) for x @ W.  latent dim is padded only to a
    multiple of 16 (bf16 sublane packing); hidden/output dims to 128 lanes.
    """
    latent_dim, hidden_size = w1.shape
    data_dim = wo_sn.shape[1]

    LP = _round_up(latent_dim, 16)
    HP = _round_up(hidden_size, LANE)
    DP = _round_up(data_dim, LANE)

    w1_p = _pad2d(w1, LP, HP).astype(jnp.bfloat16)
    w2_p = _pad2d(w2, HP, HP).astype(jnp.bfloat16)
    wo_p = _pad2d(wo_sn, HP, DP).astype(jnp.bfloat16)
    b1_p = _pad2d(b1.astype(jnp.float32), 1, HP)
    b2_p = _pad2d(b2.astype(jnp.float32), 1, HP)
    bo_p = _pad2d(bo.astype(jnp.float32), 1, DP)
    return (w1_p, b1_p, w2_p, b2_p, wo_p, bo_p)


# ------------------------------- forward ----------------------------------- #
@functools.partial(jax.jit, static_argnames=("data_dim",))
def generator_forward(z, params, data_dim):
    """z: (B, latent_dim) -> (B, data_dim). params from prepare_params()."""
    w1_p, b1_p, w2_p, b2_p, wo_p, bo_p = params
    B, latent_dim = z.shape
    LP, HP = w1_p.shape
    DP = wo_p.shape[1]

    TB, B_pad = _choose_batch_tile(B)
    grid = (B_pad // TB,)

    # Stream z lean: bf16, padded only to (B_pad, LP) — no 128-lane blowup.
    z_p = jnp.pad(z.astype(jnp.bfloat16),
                  ((0, B_pad - B), (0, LP - latent_dim)))

    flops = 2 * B_pad * (LP * HP + HP * HP + HP * DP)
    bytes_accessed = (z_p.size * 2 + B_pad * DP * 4
                      + (w1_p.size + w2_p.size + wo_p.size) * 2
                      + (b1_p.size + b2_p.size + bo_p.size) * 4)

    out_p = pl.pallas_call(
        _generator_kernel,
        out_shape=jax.ShapeDtypeStruct((B_pad, DP), jnp.float32),
        grid_spec=pltpu.PrefetchScalarGridSpec(
            num_scalar_prefetch=0,
            grid=grid,
            in_specs=[
                pl.BlockSpec((TB, LP), lambda i: (i, 0)),   # z: batch-tiled
                pl.BlockSpec((LP, HP), lambda i: (0, 0)),   # w1: resident
                pl.BlockSpec((1, HP), lambda i: (0, 0)),    # b1
                pl.BlockSpec((HP, HP), lambda i: (0, 0)),   # w2
                pl.BlockSpec((1, HP), lambda i: (0, 0)),    # b2
                pl.BlockSpec((HP, DP), lambda i: (0, 0)),   # wo (spectral-norm)
                pl.BlockSpec((1, DP), lambda i: (0, 0)),    # bo
            ],
            out_specs=pl.BlockSpec((TB, DP), lambda i: (i, 0)),
        ),
        compiler_params=pltpu.CompilerParams(
            dimension_semantics=("parallel",),
        ),
        cost_estimate=pl.CostEstimate(
            flops=flops,
            transcendentals=B_pad * DP,
            bytes_accessed=bytes_accessed,
        ),
    )(z_p, w1_p, b1_p, w2_p, b2_p, wo_p, bo_p)

    return out_p[:B, :data_dim]


# ------------------------ parameter setup (plain JAX) ---------------------- #
def _l2_normalize(v, eps=1e-12):
    return v / (jnp.linalg.norm(v) + eps)


def spectral_normalize(w_out_in, u):
    """One power iteration (SpectralNorm default) on weight of shape (out, in).

    Returns w / sigma, matching the PyTorch SpectralNorm wrapper's w_bar.
    """
    v = _l2_normalize(jnp.matmul(w_out_in.T, u))    # (in,)
    u_new = _l2_normalize(jnp.matmul(w_out_in, v))  # (out,)
    sigma = jnp.dot(u_new, jnp.matmul(w_out_in, v))
    return w_out_in / sigma


def init_params(key, latent_dim, n_hidden, hidden_size, data_dim):
    assert n_hidden == 2, "this script instantiates the common n_hidden=2 case"
    ks = jax.random.split(key, 8)
    scale = 0.1
    # stored as (in, out) for x @ W
    w1 = scale * jax.random.normal(ks[0], (latent_dim, hidden_size), jnp.float32)
    b1 = scale * jax.random.normal(ks[1], (1, hidden_size), jnp.float32)
    w2 = scale * jax.random.normal(ks[2], (hidden_size, hidden_size), jnp.float32)
    b2 = scale * jax.random.normal(ks[3], (1, hidden_size), jnp.float32)
    # final (spectral-norm) layer kept in PyTorch (out, in) layout for the
    # power iteration, then transposed to (in, out) for the kernel.
    wo_out_in = scale * jax.random.normal(ks[4], (data_dim, hidden_size), jnp.float32)
    bo = scale * jax.random.normal(ks[5], (1, data_dim), jnp.float32)
    u = jax.random.normal(ks[6], (data_dim,), jnp.float32)
    return w1, b1, w2, b2, wo_out_in, bo, u


# -------------------------------- reference -------------------------------- #
def reference_forward(z, w1, b1, w2, b2, wo_sn, bo):
    lrelu = lambda x: jnp.where(x > 0, x, 0.2 * x)
    h = lrelu(z @ w1 + b1)
    h = lrelu(h @ w2 + b2)
    return jnp.tanh(h @ wo_sn + bo)


# ---------------------------------- main ----------------------------------- #
if __name__ == "__main__":
    latent_dim, n_hidden, hidden_size, data_dim = 16, 2, 32, 8
    batch = 8

    key = jax.random.PRNGKey(0)
    k_z, k_p = jax.random.split(key)

    z = jax.random.normal(k_z, (batch, latent_dim), jnp.float32)
    w1, b1, w2, b2, wo_out_in, bo, u = init_params(
        k_p, latent_dim, n_hidden, hidden_size, data_dim)

    # spectral normalization of the output weight (one power iteration)
    wo_sn = spectral_normalize(wo_out_in, u).T  # -> (hidden_size, data_dim)

    # pad + bf16-cast params ONCE (hoisted out of the per-call forward)
    params = prepare_params(w1, b1, w2, b2, wo_sn, bo)

    out = generator_forward(z, params, data_dim)
    out = jax.block_until_ready(out)

    ref = reference_forward(z, w1, b1, w2, b2, wo_sn, bo)
    assert out.shape == (batch, data_dim)
    # bf16 MXU operands (z and hidden activations) with f32 accumulation.
    assert jnp.allclose(out, ref, atol=2e-2, rtol=2e-2), "mismatch vs reference"

    print("KERNEL_OK")
</pallas_src>

<mosaic_0001>
module attributes {stable_mosaic.version = 11 : i64} {
  func.func @_generator_kernel(%arg0: i32, %arg1: memref<16x16xbf16, #tpu.memory_space<vmem>>, %arg2: memref<16x128xbf16, #tpu.memory_space<vmem>>, %arg3: memref<1x128xf32, #tpu.memory_space<vmem>>, %arg4: memref<128x128xbf16, #tpu.memory_space<vmem>>, %arg5: memref<1x128xf32, #tpu.memory_space<vmem>>, %arg6: memref<128x128xbf16, #tpu.memory_space<vmem>>, %arg7: memref<1x128xf32, #tpu.memory_space<vmem>>, %arg8: memref<16x128xf32, #tpu.memory_space<vmem>>) attributes {dimension_semantics = [#tpu.dimension_semantics<parallel>], iteration_bounds = array<i64: 1>, scalar_prefetch = 0 : i64, scratch_operands = 0 : i64, tpu.core_type = #tpu.core_type<tc>, window_params = [{transform_indices = @transform_0, window_bounds = array<i64: 16, 16>}, {pipeline_mode = #tpu.pipeline_mode<synchronous>, transform_indices = @transform_1, window_bounds = array<i64: 16, 128>}, {pipeline_mode = #tpu.pipeline_mode<synchronous>, transform_indices = @transform_2, window_bounds = array<i64: 1, 128>}, {pipeline_mode = #tpu.pipeline_mode<synchronous>, transform_indices = @transform_3, window_bounds = array<i64: 128, 128>}, {pipeline_mode = #tpu.pipeline_mode<synchronous>, transform_indices = @transform_4, window_bounds = array<i64: 1, 128>}, {pipeline_mode = #tpu.pipeline_mode<synchronous>, transform_indices = @transform_5, window_bounds = array<i64: 128, 128>}, {pipeline_mode = #tpu.pipeline_mode<synchronous>, transform_indices = @transform_6, window_bounds = array<i64: 1, 128>}, {transform_indices = @transform_7, window_bounds = array<i64: 16, 128>}]} {
    %c0 = arith.constant 0 : index
    %c0_0 = arith.constant 0 : index
    %0 = vector.load %arg1[%c0, %c0_0] : memref<16x16xbf16, #tpu.memory_space<vmem>>, vector<16x16xbf16>
    %c0_1 = arith.constant 0 : index
    %c0_2 = arith.constant 0 : index
    %1 = vector.load %arg2[%c0_1, %c0_2] : memref<16x128xbf16, #tpu.memory_space<vmem>>, vector<16x128xbf16>
    %cst = arith.constant dense<0.000000e+00> : vector<16x128xf32>
    %2 = tpu.matmul %0, %1, %cst {dimension_numbers = #tpu.dot_dimension_numbers<[1], [0], [0], [1], [0, 0, 1, 1], [], []>} : vector<16x16xbf16>, vector<16x128xbf16>, vector<16x128xf32> -> vector<16x128xf32>
    %c0_3 = arith.constant 0 : index
    %c0_4 = arith.constant 0 : index
    %3 = vector.load %arg3[%c0_3, %c0_4] : memref<1x128xf32, #tpu.memory_space<vmem>>, vector<1x128xf32>
    %4 = vector.broadcast %3 : vector<1x128xf32> to vector<16x128xf32>
    %5 = arith.addf %2, %4 : vector<16x128xf32>
    %cst_5 = arith.constant 2.000000e-01 : f32
    %6 = vector.broadcast %cst_5 : f32 to vector<16x128xf32>
    %7 = arith.mulf %6, %5 : vector<16x128xf32>
    %8 = arith.maximumf %5, %7 : vector<16x128xf32>
    %9 = arith.truncf %8 : vector<16x128xf32> to vector<16x128xbf16>
    %c0_6 = arith.constant 0 : index
    %c0_7 = arith.constant 0 : index
    %10 = vector.load %arg4[%c0_6, %c0_7] : memref<128x128xbf16, #tpu.memory_space<vmem>>, vector<128x128xbf16>
    %cst_8 = arith.constant dense<0.000000e+00> : vector<16x128xf32>
    %11 = tpu.matmul %9, %10, %cst_8 {dimension_numbers = #tpu.dot_dimension_numbers<[1], [0], [0], [1], [0, 0, 1, 1], [], []>} : vector<16x128xbf16>, vector<128x128xbf16>, vector<16x128xf32> -> vector<16x128xf32>
    %c0_9 = arith.constant 0 : index
    %c0_10 = arith.constant 0 : index
    %12 = vector.load %arg5[%c0_9, %c0_10] : memref<1x128xf32, #tpu.memory_space<vmem>>, vector<1x128xf32>
    %13 = vector.broadcast %12 : vector<1x128xf32> to vector<16x128xf32>
    %14 = arith.addf %11, %13 : vector<16x128xf32>
    %cst_11 = arith.constant 2.000000e-01 : f32
    %15 = vector.broadcast %cst_11 : f32 to vector<16x128xf32>
    %16 = arith.mulf %15, %14 : vector<16x128xf32>
    %17 = arith.maximumf %14, %16 : vector<16x128xf32>
    %18 = arith.truncf %17 : vector<16x128xf32> to vector<16x128xbf16>
    %c0_12 = arith.constant 0 : index
    %c0_13 = arith.constant 0 : index
    %19 = vector.load %arg6[%c0_12, %c0_13] : memref<128x128xbf16, #tpu.memory_space<vmem>>, vector<128x128xbf16>
    %cst_14 = arith.constant dense<0.000000e+00> : vector<16x128xf32>
    %20 = tpu.matmul %18, %19, %cst_14 {dimension_numbers = #tpu.dot_dimension_numbers<[1], [0], [0], [1], [0, 0, 1, 1], [], []>} : vector<16x128xbf16>, vector<128x128xbf16>, vector<16x128xf32> -> vector<16x128xf32>
    %c0_15 = arith.constant 0 : index
    %c0_16 = arith.constant 0 : index
    %21 = vector.load %arg7[%c0_15, %c0_16] : memref<1x128xf32, #tpu.memory_space<vmem>>, vector<1x128xf32>
    %22 = vector.broadcast %21 : vector<1x128xf32> to vector<16x128xf32>
    %23 = arith.addf %20, %22 : vector<16x128xf32>
    %24 = math.tanh %23 : vector<16x128xf32>
    %c0_17 = arith.constant 0 : index
    %c0_18 = arith.constant 0 : index
    %25 = vector.load %arg8[%c0_17, %c0_18] : memref<16x128xf32, #tpu.memory_space<vmem>>, vector<16x128xf32>
    tpu.vector_store %arg8[%c0_17, %c0_18], %24 {strides = array<i32>} : memref<16x128xf32, #tpu.memory_space<vmem>>, vector<16x128xf32>,
    return
  }
  func.func @transform_0(%arg0: i32) -> (i32, i32) {
    %c0_i32 = arith.constant 0 : i32
    %c0_i32_0 = arith.constant 0 : i32
    return %arg0, %c0_i32 : i32, i32
  }
  func.func @transform_1(%arg0: i32) -> (i32, i32) {
    %c0_i32 = arith.constant 0 : i32
    %c0_i32_0 = arith.constant 0 : i32
    %c0_i32_1 = arith.constant 0 : i32
    return %c0_i32, %c0_i32_0 : i32, i32
  }
  func.func @transform_2(%arg0: i32) -> (i32, i32) {
    %c0_i32 = arith.constant 0 : i32
    %c0_i32_0 = arith.constant 0 : i32
    %c0_i32_1 = arith.constant 0 : i32
    return %c0_i32, %c0_i32_0 : i32, i32
  }
  func.func @transform_3(%arg0: i32) -> (i32, i32) {
    %c0_i32 = arith.constant 0 : i32
    %c0_i32_0 = arith.constant 0 : i32
    %c0_i32_1 = arith.constant 0 : i32
    return %c0_i32, %c0_i32_0 : i32, i32
  }
  func.func @transform_4(%arg0: i32) -> (i32, i32) {
    %c0_i32 = arith.constant 0 : i32
    %c0_i32_0 = arith.constant 0 : i32
    %c0_i32_1 = arith.constant 0 : i32
    return %c0_i32, %c0_i32_0 : i32, i32
  }
  func.func @transform_5(%arg0: i32) -> (i32, i32) {
    %c0_i32 = arith.constant 0 : i32
    %c0_i32_0 = arith.constant 0 : i32
    %c0_i32_1 = arith.constant 0 : i32
    return %c0_i32, %c0_i32_0 : i32, i32
  }
  func.func @transform_6(%arg0: i32) -> (i32, i32) {
    %c0_i32 = arith.constant 0 : i32
    %c0_i32_0 = arith.constant 0 : i32
    %c0_i32_1 = arith.constant 0 : i32
    return %c0_i32, %c0_i32_0 : i32, i32
  }
  func.func @transform_7(%arg0: i32) -> (i32, i32) {
    %c0_i32 = arith.constant 0 : i32
    %c0_i32_0 = arith.constant 0 : i32
    return %arg0, %c0_i32 : i32, i32
  }
}

</mosaic_0001>

<llo_original>
// kernel: generator_forward.1
$region0: #{generator_forward.1}
  #allocation0 [shape = 'u32[]', space=smem, size = 0x4, offset = 0x4, fixed_abs, tag = 'smem constant byte address 0x4 - core index']
  #allocation1 [shape = 'u32[72,128]{1,0:T(1,128)}', space=vmem, size = 0x9000, scoped, tag = 'internal scratch']
  %s0 = inlined_call_operand.vmem [shape: bf16[16,16], index: 0, kind: input, shape index: {}]
  %s1 = inlined_call_operand.vmem [shape: bf16[16,128], index: 1, kind: input, shape index: {}]
  %s2 = inlined_call_operand.vmem [shape: f32[1,128], index: 2, kind: input, shape index: {}]
  %s3 = inlined_call_operand.hbm [shape: bf16[128,128], index: 3, kind: input, shape index: {}]
  %s4 = inlined_call_operand.vmem [shape: f32[1,128], index: 4, kind: input, shape index: {}]
  %s5 = inlined_call_operand.hbm [shape: bf16[128,128], index: 5, kind: input, shape index: {}]
  %s6 = inlined_call_operand.vmem [shape: f32[1,128], index: 6, kind: input, shape index: {}]
  %s7 = inlined_call_operand.vmem [shape: f32[16,128], index: 7, kind: output, shape index: {}]
  %s8 = sld [smem:[#allocation0]]
  $region46: #{generator_forward.1} parent=0
    _
  %s10 = ssub.s32 1, %s8
  %s11 = scalar_select 0, %s10, %s8
  $region1: #{generator_forward.1} parent=0
    #allocation2 [shape = 'u8[32768]{0}', space=vmem, size = 0x8000, scoped, tag = 'input window, operand 3, single buffered']
    #allocation3 [shape = 's32[1]{0}', space=sflag, size = 0x4, scoped, tag = 'scoped memory for generator_forward.1']
    #allocation4 [shape = 'u8[32768]{0}', space=vmem, size = 0x8000, scoped, tag = 'input window, operand 5, single buffered']
    #allocation5 [shape = 's32[1]{0}', space=sflag, size = 0x4, scoped, tag = 'scoped memory for generator_forward.1']
    %12 = vsyncpa [#allocation3], 0
    %13 = vsyncpa [#allocation5], 0
    // Predicated region
    $region2: #{generator_forward.1} parent=1 // pred_check
      _
    $region3: #{generator_forward.1} parent=1 // pred_check_branch
      %15 = sbr.rel (0) target = $region5
    $region4: #{generator_forward.1} parent=1 // pred_region
      _
    $region5: #{generator_forward.1} parent=1 // pred_fallthru
      _
    // Predicated region
    $region6: #{generator_forward.1} parent=1 // pred_check
      _
    $region7: #{generator_forward.1} parent=1 // pred_check_branch
      %17 = sbr.rel (0) target = $region9
    $region8: #{generator_forward.1} parent=1 // pred_region
      _
    $region9: #{generator_forward.1} parent=1 // pred_fallthru
      _
    // Predicated region
    $region10: #{generator_forward.1} parent=1 // pred_check
      _
    $region11: #{generator_forward.1} parent=1 // pred_check_branch
      %19 = sbr.rel (0) target = $region13
    $region12: #{generator_forward.1} parent=1 // pred_region
      _
    $region13: #{generator_forward.1} parent=1 // pred_fallthru
      _
    // Predicated region
    $region14: #{generator_forward.1} parent=1 // pred_check
      _
    $region15: #{generator_forward.1} parent=1 // pred_check_branch
      %21 = sbr.rel (0) target = $region17
    $region16: #{generator_forward.1} parent=1 // pred_region
      %23 = vsyncadd [#allocation3], 0
      %s24 = sshll.u32 %s3, 4
      %s25 = int_to_ptr.hbm [resolvable:$true] %s24
      %s26 = sshll.u32 [#allocation2], 4
      %s27 = int_to_ptr.vmem [resolvable:$true] %s26
      %32 = dma.hbm_to_vmem [thread:$0]  %s25, 1024, %s27, [#allocation3], 64, 64, 4
    $region17: #{generator_forward.1} parent=1 // pred_fallthru
      _
    // Predicated region
    $region18: #{generator_forward.1} parent=1 // pred_check
      _
    $region19: #{generator_forward.1} parent=1 // pred_check_branch
      %34 = sbr.rel (0) target = $region21
    $region20: #{generator_forward.1} parent=1 // pred_region
      _
    $region21: #{generator_forward.1} parent=1 // pred_fallthru
      _
    // Predicated region
    $region22: #{generator_forward.1} parent=1 // pred_check
      _
    $region23: #{generator_forward.1} parent=1 // pred_check_branch
      %36 = sbr.rel (0) target = $region25
    $region24: #{generator_forward.1} parent=1 // pred_region
      %38 = vsyncadd [#allocation5], 0
      %s39 = sshll.u32 %s5, 4
      %s40 = int_to_ptr.hbm [resolvable:$true] %s39
      %s41 = sshll.u32 [#allocation4], 4
      %s42 = int_to_ptr.vmem [resolvable:$true] %s41
      %47 = dma.hbm_to_vmem [thread:$0]  %s40, 1024, %s42, [#allocation5], 64, 64, 4
    $region25: #{generator_forward.1} parent=1 // pred_fallthru
      _
    // Predicated region
    $region26: #{generator_forward.1} parent=1 // pred_check
      _
    $region27: #{generator_forward.1} parent=1 // pred_check_branch
      %49 = sbr.rel (0) target = $region29
    $region28: #{generator_forward.1} parent=1 // pred_region
      _
    $region29: #{generator_forward.1} parent=1 // pred_fallthru
      _
    // Predicated region
    $region30: #{generator_forward.1} parent=1 // pred_check
      _
    $region31: #{generator_forward.1} parent=1 // pred_check_branch
      %51 = sbr.rel (0) target = $region33
    $region32: #{generator_forward.1} parent=1 // pred_region
      %53 = dma.done [#allocation3], 1024
    $region33: #{generator_forward.1} parent=1 // pred_fallthru
      _
    // Predicated region
    $region34: #{generator_forward.1} parent=1 // pred_check
      _
    $region35: #{generator_forward.1} parent=1 // pred_check_branch
      %55 = sbr.rel (0) target = $region37
    $region36: #{generator_forward.1} parent=1 // pred_region
      %57 = dma.done [#allocation5], 1024
    $region37: #{generator_forward.1} parent=1 // pred_fallthru
      _
    %v59 = vld [vmem:[%s0] sm:$0xf]
    %v60 = vld [vmem:[%s0 + $0x4] sm:$0xf]
    %v61 = vld [vmem:[%s1] sm:$0xf]
    %v62 = vld [vmem:[%s1 + $0x4] sm:$0xf]
    %v63 = vld [vmem:[%s2] sm:$0x1]
    %v65 = vperm.slane %v63, 0
    %v69 = vunpack.c.l.b16 %v59
    %v70 = vunpack.c.l.b16 %v60
    %v71 = vpack.c.b16 %v70, %v69
    %v74 = vunpack.c.l.b16 %v61
    %v75 = vunpack.c.l.b16 %v62
    %v76 = vpack.c.b16 %v75, %v74
    %vm78 = vcmask 130048
    %v80 = vsel %vm78, %v71, 0
    %82 = vmatpush.bf16.msra.mxu0 0
    %83 = vmatpush.bf16.msra.mxu0 0
    %84 = vmatpush.bf16.msra.mxu0 0
    %85 = vmatpush.bf16.msra.mxu0 0
    %86 = vmatpush.bf16.msra.mxu0 0
    %87 = vmatpush.bf16.msra.mxu0 0
    %88 = vmatpush.bf16.msra.mxu0 0
    %89 = vmatpush.bf16.msra.mxu0 %v76
    %90 = vmatmul.bf16.gmra.mxu0 %v80
    %v91 = vpop.f32.mrf.mxu0
    %v92 = vadd.f32 %v65, %v91
    %v93 = vpop.f32.mrf.mxu0
    %v94 = vadd.f32 %v65, %v93
    %95 = vdwg.mxu0
    %v96 = vmul.f32 %v92, 0.2
    %v97 = vmul.f32 %v94, 0.2
    %v98 = vmax.f32 %v92, %v96
    %v99 = vmax.f32 %v94, %v97
    %v100 = vpack.c.bf16 %v99, %v98
    %v101 = vld [vmem:[#allocation2] sm:$0xf]
    %v102 = vld [vmem:[#allocation2 + $0x4] sm:$0xf]
    %v103 = vld [vmem:[#allocation2 + $0x8] sm:$0xf]
    %v104 = vld [vmem:[#allocation2 + $0xc] sm:$0xf]
    %v105 = vld [vmem:[#allocation2 + $0x10] sm:$0xf]
    %v106 = vld [vmem:[#allocation2 + $0x14] sm:$0xf]
    %v107 = vld [vmem:[#allocation2 + $0x18] sm:$0xf]
    %v108 = vld [vmem:[#allocation2 + $0x1c] sm:$0xf]
    %v109 = vld [vmem:[#allocation2 + $0x20] sm:$0xf]
    %v110 = vld [vmem:[#allocation2 + $0x24] sm:$0xf]
    %v111 = vld [vmem:[#allocation2 + $0x28] sm:$0xf]
    %v112 = vld [vmem:[#allocation2 + $0x2c] sm:$0xf]
    %v113 = vld [vmem:[#allocation2 + $0x30] sm:$0xf]
    %v114 = vld [vmem:[#allocation2 + $0x34] sm:$0xf]
    %v115 = vld [vmem:[#allocation2 + $0x38] sm:$0xf]
    %v116 = vld [vmem:[#allocation2 + $0x3c] sm:$0xf]
    %v117 = vld [vmem:[%s4] sm:$0x1]
    %v119 = vperm.slane %v117, 0
    %v137 = vunpack.c.l.b16 %v101
    %v138 = vunpack.c.l.b16 %v102
    %v139 = vunpack.c.l.b16 %v103
    %v140 = vunpack.c.l.b16 %v104
    %v141 = vunpack.c.l.b16 %v105
    %v142 = vunpack.c.l.b16 %v106
    %v143 = vunpack.c.l.b16 %v107
    %v144 = vunpack.c.l.b16 %v108
    %v145 = vunpack.c.l.b16 %v109
    %v146 = vunpack.c.l.b16 %v110
    %v147 = vunpack.c.l.b16 %v111
    %v148 = vunpack.c.l.b16 %v112
    %v149 = vunpack.c.l.b16 %v113
    %v150 = vunpack.c.l.b16 %v114
    %v151 = vunpack.c.l.b16 %v115
    %v152 = vunpack.c.l.b16 %v116
    %v153 = vpack.c.b16 %v138, %v137
    %v154 = vpack.c.b16 %v140, %v139
    %v155 = vpack.c.b16 %v142, %v141
    %v156 = vpack.c.b16 %v144, %v143
    %v157 = vpack.c.b16 %v146, %v145
    %v158 = vpack.c.b16 %v148, %v147
    %v159 = vpack.c.b16 %v150, %v149
    %v160 = vpack.c.b16 %v152, %v151
    %169 = vmatpush.bf16.msra.mxu0 %v160
    %170 = vmatpush.bf16.msra.mxu0 %v159
    %171 = vmatpush.bf16.msra.mxu0 %v158
    %172 = vmatpush.bf16.msra.mxu0 %v157
    %173 = vmatpush.bf16.msra.mxu0 %v156
    %174 = vmatpush.bf16.msra.mxu0 %v155
    %175 = vmatpush.bf16.msra.mxu0 %v154
    %176 = vmatpush.bf16.msra.mxu0 %v153
    %177 = vmatmul.bf16.gmra.mxu0 %v100
    %v178 = vpop.f32.mrf.mxu0
    %v179 = vadd.f32 %v119, %v178
    %v180 = vpop.f32.mrf.mxu0
    %v181 = vadd.f32 %v119, %v180
    %182 = vdwg.mxu0
    %v183 = vmul.f32 %v179, 0.2
    %v184 = vmul.f32 %v181, 0.2
    %v185 = vmax.f32 %v179, %v183
    %v186 = vmax.f32 %v181, %v184
    %v187 = vpack.c.bf16 %v186, %v185
    %v188 = vld [vmem:[#allocation4] sm:$0xf]
    %v189 = vld [vmem:[#allocation4 + $0x4] sm:$0xf]
    %v190 = vld [vmem:[#allocation4 + $0x8] sm:$0xf]
    %v191 = vld [vmem:[#allocation4 + $0xc] sm:$0xf]
    %v192 = vld [vmem:[#allocation4 + $0x10] sm:$0xf]
    %v193 = vld [vmem:[#allocation4 + $0x14] sm:$0xf]
    %v194 = vld [vmem:[#allocation4 + $0x18] sm:$0xf]
    %v195 = vld [vmem:[#allocation4 + $0x1c] sm:$0xf]
    %v196 = vld [vmem:[#allocation4 + $0x20] sm:$0xf]
    %v197 = vld [vmem:[#allocation4 + $0x24] sm:$0xf]
    %v198 = vld [vmem:[#allocation4 + $0x28] sm:$0xf]
    %v199 = vld [vmem:[#allocation4 + $0x2c] sm:$0xf]
    %v200 = vld [vmem:[#allocation4 + $0x30] sm:$0xf]
    %v201 = vld [vmem:[#allocation4 + $0x34] sm:$0xf]
    %v202 = vld [vmem:[#allocation4 + $0x38] sm:$0xf]
    %v203 = vld [vmem:[#allocation4 + $0x3c] sm:$0xf]
    %v204 = vld [vmem:[%s6] sm:$0x1]
    %v206 = vperm.slane %v204, 0
    %v224 = vunpack.c.l.b16 %v188
    %v225 = vunpack.c.l.b16 %v189
    %v226 = vunpack.c.l.b16 %v190
    %v227 = vunpack.c.l.b16 %v191
    %v228 = vunpack.c.l.b16 %v192
    %v229 = vunpack.c.l.b16 %v193
    %v230 = vunpack.c.l.b16 %v194
    %v231 = vunpack.c.l.b16 %v195
    %v232 = vunpack.c.l.b16 %v196
    %v233 = vunpack.c.l.b16 %v197
    %v234 = vunpack.c.l.b16 %v198
    %v235 = vunpack.c.l.b16 %v199
    %v236 = vunpack.c.l.b16 %v200
    %v237 = vunpack.c.l.b16 %v201
    %v238 = vunpack.c.l.b16 %v202
    %v239 = vunpack.c.l.b16 %v203
    %v240 = vpack.c.b16 %v225, %v224
    %v241 = vpack.c.b16 %v227, %v226
    %v242 = vpack.c.b16 %v229, %v228
    %v243 = vpack.c.b16 %v231, %v230
    %v244 = vpack.c.b16 %v233, %v232
    %v245 = vpack.c.b16 %v235, %v234
    %v246 = vpack.c.b16 %v237, %v236
    %v247 = vpack.c.b16 %v239, %v238
    %256 = vmatpush.bf16.msra.mxu0 %v247
    %257 = vmatpush.bf16.msra.mxu0 %v246
    %258 = vmatpush.bf16.msra.mxu0 %v245
    %259 = vmatpush.bf16.msra.mxu0 %v244
    %260 = vmatpush.bf16.msra.mxu0 %v243
    %261 = vmatpush.bf16.msra.mxu0 %v242
    %262 = vmatpush.bf16.msra.mxu0 %v241
    %263 = vmatpush.bf16.msra.mxu0 %v240
    %264 = vmatmul.bf16.gmra.mxu0 %v187
    %v265 = vpop.f32.mrf.mxu0
    %v266 = vadd.f32 %v206, %v265
    %v267 = vpop.f32.mrf.mxu0
    %v268 = vadd.f32 %v206, %v267
    %269 = vdwg.mxu0
    %v270 = vtanh.pop %v266
    %v271 = vtanh.pop %v268
    %272 = vst [vmem:[%s7] sm:$0xff] %v270
    %273 = vst [vmem:[%s7 + $0x8] sm:$0xff] %v271
    // Predicated region
    $region38: #{generator_forward.1} parent=1 // pred_check
      _
    $region39: #{generator_forward.1} parent=1 // pred_check_branch
      %275 = sbr.rel (0) target = $region41
    $region40: #{generator_forward.1} parent=1 // pred_region
      _
    $region41: #{generator_forward.1} parent=1 // pred_fallthru
      _
    // Predicated region
    $region42: #{generator_forward.1} parent=1 // pred_check
      _
    $region43: #{generator_forward.1} parent=1 // pred_check_branch
      %277 = sbr.rel (0) target = $region45
    $region44: #{generator_forward.1} parent=1 // pred_region
      _
    $region45: #{generator_forward.1} parent=1 // pred_fallthru
      _
    %278 = vsyncpa [#allocation3], 1
    %279 = vsyncpa [#allocation5], 1

</llo_original>
